<compile_context>
chip_gen: v7x
topology: tpu7x:2x2x1
jax: 0.10.0
libtpu: 0.0.40
codegen_flags: <defaults>
</compile_context>

<pallas_src>
import jax
import jax.numpy as jnp
from jax import lax
from jax.experimental import pallas as pl
from jax.experimental.pallas import tpu as pltpu


def _residual_block_kernel(x_ref, w1_ref, w2_ref, b1_ref, b2_ref, o_ref,
                           h_vmem):
    # x_ref : (1, H+2, W*Cin)   bf16, one zero halo row top/bottom (wrapper pad)
    # w1_ref: (3, W*Cin, W*Cout)  bf16 banded weights (kh-indexed, BN1 folded)
    # w2_ref: (3, W*Cout, W*Cout) bf16 banded weights (kh-indexed, BN2 folded)
    # b1/b2 : (1, W*Cout) f32 per-channel bias tiled over W
    # o_ref : (1, H, W*Cout) bf16 (lane-dense output block)
    # h_vmem: (H+2, W*Cout) bf16 scratch: conv1 output + conv2's zero row halo
    hp2 = x_ref.shape[1]          # H + 2
    h_rows = hp2 - 2              # H
    wco = o_ref.shape[2]          # W * Cout

    # ---- conv1 (BN1 scale folded) + bias + ReLU -----------------------------
    # Each kh tap is a sublane-shifted slice of the row-padded input; the kw
    # taps and W zero-padding are encoded in the banded weight matrix, so the
    # whole tap is one lane-dense MXU matmul with f32 accumulation.
    acc1 = jnp.zeros((h_rows, wco), jnp.float32)
    for kh in range(3):
        acc1 += jnp.dot(x_ref[0, kh:kh + h_rows, :], w1_ref[kh],
                        preferred_element_type=jnp.float32)
    h = jnp.maximum(acc1 + b1_ref[...], 0.0)          # f32 elementwise (v5e ok)

    # Stash intermediate on-chip (never hits HBM); zero only the 2 halo rows.
    zero_row = jnp.zeros((1, wco), h_vmem.dtype)
    h_vmem[0:1, :] = zero_row
    h_vmem[hp2 - 1:hp2, :] = zero_row
    h_vmem[1:hp2 - 1, :] = h.astype(h_vmem.dtype)

    # ---- conv2 (BN2 scale folded) + bias + final ReLU ------------------------
    acc2 = jnp.zeros((h_rows, wco), jnp.float32)
    for kh in range(3):
        acc2 += jnp.dot(h_vmem[kh:kh + h_rows, :], w2_ref[kh],
                        preferred_element_type=jnp.float32)
    y = jnp.maximum(acc2 + b2_ref[...], 0.0)
    o_ref[0] = y.astype(o_ref.dtype)                  # unmasked 128-lane store


def _fold_bn(gamma, beta, mean, var, eps=1e-5):
    scale = gamma / jnp.sqrt(var + eps)
    bias = beta - mean * scale
    return scale, bias


def _banded_conv_weights(w_hwio, scale, width):
    """Fold the BN scale into a 3x3 conv weight and build, for each kh, the
    (width*Cin, width*Cout) banded matrix mapping one lane-dense image row
    (W, Cin) -> (W, Cout), including the zero padding along W."""
    kh_n, kw_n, ci, co = w_hwio.shape
    w = w_hwio.astype(jnp.float32) * scale[None, None, None, :]
    mats = []
    for kh in range(kh_n):
        m = jnp.zeros((width, ci, width, co), jnp.float32)
        for kw in range(kw_n):
            lo = max(0, 1 - kw)                    # valid output columns
            hi = min(width, width + 1 - kw)
            w_out = jnp.arange(lo, hi)
            w_in = w_out + (kw - 1)
            m = m.at[w_in, :, w_out, :].set(
                jnp.broadcast_to(w[kh, kw], (hi - lo, ci, co)))
        mats.append(m.reshape(width * ci, width * co))
    return jnp.stack(mats, 0).astype(jnp.bfloat16)     # (3, W*Ci, W*Co)


def residual_block_forward(x_nchw, params):
    """ResidualBlock.forward (stride=1, downsample=None); NCHW in / NCHW out."""
    N, Cin, H, W = x_nchw.shape
    Cout = params["w1"].shape[0]                       # OIHW PyTorch layout

    # OIHW -> HWIO
    w1 = jnp.transpose(params["w1"], (2, 3, 1, 0))
    w2 = jnp.transpose(params["w2"], (2, 3, 1, 0))
    s1, b1 = _fold_bn(params["bn1_gamma"], params["bn1_beta"],
                      params["bn1_mean"], params["bn1_var"])
    s2, b2 = _fold_bn(params["bn2_gamma"], params["bn2_beta"],
                      params["bn2_mean"], params["bn2_var"])

    w1b = _banded_conv_weights(w1, s1, W)              # (3, W*Cin,  W*Cout)
    w2b = _banded_conv_weights(w2, s2, W)              # (3, W*Cout, W*Cout)
    b1t = jnp.tile(b1, W).reshape(1, W * Cout).astype(jnp.float32)
    b2t = jnp.tile(b2, W).reshape(1, W * Cout).astype(jnp.float32)

    # NCHW -> lane-dense (N, H, W*Cin) bf16 with one zero halo row top/bottom.
    x = jnp.transpose(x_nchw, (0, 2, 3, 1)).astype(jnp.bfloat16)
    x = x.reshape(N, H, W * Cin)
    x = jnp.pad(x, ((0, 0), (1, 1), (0, 0)))

    out = pl.pallas_call(
        _residual_block_kernel,
        out_shape=jax.ShapeDtypeStruct((N, H, W * Cout), jnp.bfloat16),
        grid=(N,),
        in_specs=[
            pl.BlockSpec((1, H + 2, W * Cin), lambda n: (n, 0, 0)),   # x
            pl.BlockSpec((3, W * Cin, W * Cout), lambda n: (0, 0, 0)),  # w1 (resident)
            pl.BlockSpec((3, W * Cout, W * Cout), lambda n: (0, 0, 0)),  # w2 (resident)
            pl.BlockSpec((1, W * Cout), lambda n: (0, 0)),            # b1
            pl.BlockSpec((1, W * Cout), lambda n: (0, 0)),            # b2
        ],
        out_specs=pl.BlockSpec((1, H, W * Cout), lambda n: (n, 0, 0)),
        scratch_shapes=[pltpu.VMEM((H + 2, W * Cout), jnp.bfloat16)],
        compiler_params=pltpu.CompilerParams(
            dimension_semantics=("parallel",)),
    )(x, w1b, w2b, b1t, b2t)

    # (N, H, W*Cout) bf16 -> NCHW f32
    out = out.reshape(N, H, W, Cout).astype(jnp.float32)
    return jnp.transpose(out, (0, 3, 1, 2))


def _reference_forward(x_nchw, params):
    """Plain-JAX reference mirroring the kernel's bf16 storage quantization."""
    x = jnp.transpose(x_nchw, (0, 2, 3, 1)).astype(jnp.bfloat16).astype(jnp.float32)
    w1 = jnp.transpose(params["w1"], (2, 3, 1, 0)).astype(jnp.float32)
    w2 = jnp.transpose(params["w2"], (2, 3, 1, 0)).astype(jnp.float32)
    s1, b1 = _fold_bn(params["bn1_gamma"], params["bn1_beta"],
                      params["bn1_mean"], params["bn1_var"])
    s2, b2 = _fold_bn(params["bn2_gamma"], params["bn2_beta"],
                      params["bn2_mean"], params["bn2_var"])
    w1f = (w1 * s1).astype(jnp.bfloat16).astype(jnp.float32)
    w2f = (w2 * s2).astype(jnp.bfloat16).astype(jnp.float32)
    dn = ("NHWC", "HWIO", "NHWC")

    h = lax.conv_general_dilated(x, w1f, (1, 1), "SAME", dimension_numbers=dn,
                                 precision=lax.Precision.HIGHEST)
    h = jnp.maximum(h + b1, 0.0)
    h = h.astype(jnp.bfloat16).astype(jnp.float32)     # mirror VMEM bf16 h
    y = lax.conv_general_dilated(h, w2f, (1, 1), "SAME", dimension_numbers=dn,
                                 precision=lax.Precision.HIGHEST)
    y = jnp.maximum(y + b2, 0.0)
    y = y.astype(jnp.bfloat16).astype(jnp.float32)     # mirror bf16 output
    return jnp.transpose(y, (0, 3, 1, 2))


if __name__ == "__main__":
    N, Cin, Cout, H, W = 2, 4, 8, 16, 16
    key = jax.random.PRNGKey(0)
    k = jax.random.split(key, 9)

    params = {
        # PyTorch Conv2d layout: OIHW (Cout, Cin, 3, 3), bias=False
        "w1": 0.1 * jax.random.normal(k[0], (Cout, Cin, 3, 3), jnp.float32),
        "w2": 0.1 * jax.random.normal(k[1], (Cout, Cout, 3, 3), jnp.float32),
        # BatchNorm2d parameters, folded as inference-mode affine
        "bn1_gamma": 1.0 + 0.1 * jax.random.normal(k[2], (Cout,), jnp.float32),
        "bn1_beta": 0.1 * jax.random.normal(k[3], (Cout,), jnp.float32),
        "bn1_mean": 0.05 * jax.random.normal(k[4], (Cout,), jnp.float32),
        "bn1_var": jnp.ones((Cout,), jnp.float32),
        "bn2_gamma": 1.0 + 0.1 * jax.random.normal(k[5], (Cout,), jnp.float32),
        "bn2_beta": 0.1 * jax.random.normal(k[6], (Cout,), jnp.float32),
        "bn2_mean": 0.05 * jax.random.normal(k[7], (Cout,), jnp.float32),
        "bn2_var": jnp.ones((Cout,), jnp.float32),
    }
    x = jax.random.normal(k[8], (N, Cin, H, W), jnp.float32)

    out = jax.block_until_ready(jax.jit(residual_block_forward)(x, params))
    ref = jax.block_until_ready(_reference_forward(x, params))

    assert out.shape == (N, Cout, H, W), out.shape
    err = float(jnp.max(jnp.abs(out - ref)))
    assert err < 2e-2, err
    print("KERNEL_OK")
</pallas_src>

<mosaic_0001>
module attributes {stable_mosaic.version = 11 : i64} {
  func.func @_residual_block_kernel(%arg0: i32, %arg1: memref<1x18x64xbf16, #tpu.memory_space<vmem>>, %arg2: memref<3x64x128xbf16, #tpu.memory_space<vmem>>, %arg3: memref<3x128x128xbf16, #tpu.memory_space<vmem>>, %arg4: memref<1x128xf32, #tpu.memory_space<vmem>>, %arg5: memref<1x128xf32, #tpu.memory_space<vmem>>, %arg6: memref<1x16x128xbf16, #tpu.memory_space<vmem>>, %arg7: memref<18x128xbf16, #tpu.memory_space<vmem>>) attributes {dimension_semantics = [#tpu.dimension_semantics<parallel>], iteration_bounds = array<i64: 2>, scalar_prefetch = 0 : i64, scratch_operands = 1 : i64, tpu.core_type = #tpu.core_type<tc>, window_params = [{transform_indices = @transform_0, window_bounds = array<i64: 1, 18, 64>}, {pipeline_mode = #tpu.pipeline_mode<synchronous>, transform_indices = @transform_1, window_bounds = array<i64: 3, 64, 128>}, {pipeline_mode = #tpu.pipeline_mode<synchronous>, transform_indices = @transform_2, window_bounds = array<i64: 3, 128, 128>}, {pipeline_mode = #tpu.pipeline_mode<synchronous>, transform_indices = @transform_3, window_bounds = array<i64: 1, 128>}, {pipeline_mode = #tpu.pipeline_mode<synchronous>, transform_indices = @transform_4, window_bounds = array<i64: 1, 128>}, {transform_indices = @transform_5, window_bounds = array<i64: 1, 16, 128>}]} {
    %cst = arith.constant 0.000000e+00 : f32
    %0 = vector.broadcast %cst : f32 to vector<16x128xf32>
    %c0 = arith.constant 0 : index
    %c0_0 = arith.constant 0 : index
    %c0_1 = arith.constant 0 : index
    %1 = vector.load %arg1[%c0, %c0_0, %c0_1] : memref<1x18x64xbf16, #tpu.memory_space<vmem>>, vector<1x16x64xbf16>
    %2 = vector.shape_cast %1 : vector<1x16x64xbf16> to vector<16x64xbf16>
    %c0_2 = arith.constant 0 : index
    %c0_3 = arith.constant 0 : index
    %c0_4 = arith.constant 0 : index
    %3 = vector.load %arg2[%c0_2, %c0_3, %c0_4] : memref<3x64x128xbf16, #tpu.memory_space<vmem>>, vector<1x64x128xbf16>
    %4 = vector.shape_cast %3 : vector<1x64x128xbf16> to vector<64x128xbf16>
    %cst_5 = arith.constant dense<0.000000e+00> : vector<16x128xf32>
    %5 = tpu.matmul %2, %4, %cst_5 {dimension_numbers = #tpu.dot_dimension_numbers<[1], [0], [0], [1], [0, 0, 1, 1], [], []>} : vector<16x64xbf16>, vector<64x128xbf16>, vector<16x128xf32> -> vector<16x128xf32>
    %6 = arith.addf %0, %5 : vector<16x128xf32>
    %c0_6 = arith.constant 0 : index
    %c1 = arith.constant 1 : index
    %c0_7 = arith.constant 0 : index
    %7 = vector.load %arg1[%c0_6, %c1, %c0_7] : memref<1x18x64xbf16, #tpu.memory_space<vmem>>, vector<1x16x64xbf16>
    %8 = vector.shape_cast %7 : vector<1x16x64xbf16> to vector<16x64xbf16>
    %c1_8 = arith.constant 1 : index
    %c0_9 = arith.constant 0 : index
    %c0_10 = arith.constant 0 : index
    %9 = vector.load %arg2[%c1_8, %c0_9, %c0_10] : memref<3x64x128xbf16, #tpu.memory_space<vmem>>, vector<1x64x128xbf16>
    %10 = vector.shape_cast %9 : vector<1x64x128xbf16> to vector<64x128xbf16>
    %cst_11 = arith.constant dense<0.000000e+00> : vector<16x128xf32>
    %11 = tpu.matmul %8, %10, %cst_11 {dimension_numbers = #tpu.dot_dimension_numbers<[1], [0], [0], [1], [0, 0, 1, 1], [], []>} : vector<16x64xbf16>, vector<64x128xbf16>, vector<16x128xf32> -> vector<16x128xf32>
    %12 = arith.addf %6, %11 : vector<16x128xf32>
    %c0_12 = arith.constant 0 : index
    %c2 = arith.constant 2 : index
    %c0_13 = arith.constant 0 : index
    %13 = vector.load %arg1[%c0_12, %c2, %c0_13] : memref<1x18x64xbf16, #tpu.memory_space<vmem>>, vector<1x16x64xbf16>
    %14 = vector.shape_cast %13 : vector<1x16x64xbf16> to vector<16x64xbf16>
    %c2_14 = arith.constant 2 : index
    %c0_15 = arith.constant 0 : index
    %c0_16 = arith.constant 0 : index
    %15 = vector.load %arg2[%c2_14, %c0_15, %c0_16] : memref<3x64x128xbf16, #tpu.memory_space<vmem>>, vector<1x64x128xbf16>
    %16 = vector.shape_cast %15 : vector<1x64x128xbf16> to vector<64x128xbf16>
    %cst_17 = arith.constant dense<0.000000e+00> : vector<16x128xf32>
    %17 = tpu.matmul %14, %16, %cst_17 {dimension_numbers = #tpu.dot_dimension_numbers<[1], [0], [0], [1], [0, 0, 1, 1], [], []>} : vector<16x64xbf16>, vector<64x128xbf16>, vector<16x128xf32> -> vector<16x128xf32>
    %18 = arith.addf %12, %17 : vector<16x128xf32>
    %c0_18 = arith.constant 0 : index
    %c0_19 = arith.constant 0 : index
    %19 = vector.load %arg4[%c0_18, %c0_19] : memref<1x128xf32, #tpu.memory_space<vmem>>, vector<1x128xf32>
    %20 = vector.broadcast %19 : vector<1x128xf32> to vector<16x128xf32>
    %21 = arith.addf %18, %20 : vector<16x128xf32>
    %cst_20 = arith.constant 0.000000e+00 : f32
    %22 = vector.broadcast %cst_20 : f32 to vector<16x128xf32>
    %23 = arith.maximumf %21, %22 : vector<16x128xf32>
    %cst_21 = arith.constant 0.000000e+00 : bf16
    %24 = vector.broadcast %cst_21 : bf16 to vector<1x128xbf16>
    %c0_22 = arith.constant 0 : index
    %c0_23 = arith.constant 0 : index
    %25 = vector.load %arg7[%c0_22, %c0_23] : memref<18x128xbf16, #tpu.memory_space<vmem>>, vector<1x128xbf16>
    tpu.vector_store %arg7[%c0_22, %c0_23], %24 {strides = array<i32>} : memref<18x128xbf16, #tpu.memory_space<vmem>>, vector<1x128xbf16>,
    %c17 = arith.constant 17 : index
    %c0_24 = arith.constant 0 : index
    %26 = vector.load %arg7[%c17, %c0_24] : memref<18x128xbf16, #tpu.memory_space<vmem>>, vector<1x128xbf16>
    tpu.vector_store %arg7[%c17, %c0_24], %24 {strides = array<i32>} : memref<18x128xbf16, #tpu.memory_space<vmem>>, vector<1x128xbf16>,
    %27 = arith.truncf %23 : vector<16x128xf32> to vector<16x128xbf16>
    %c1_25 = arith.constant 1 : index
    %c0_26 = arith.constant 0 : index
    %28 = vector.load %arg7[%c1_25, %c0_26] : memref<18x128xbf16, #tpu.memory_space<vmem>>, vector<16x128xbf16>
    tpu.vector_store %arg7[%c1_25, %c0_26], %27 {strides = array<i32>} : memref<18x128xbf16, #tpu.memory_space<vmem>>, vector<16x128xbf16>,
    %cst_27 = arith.constant 0.000000e+00 : f32
    %29 = vector.broadcast %cst_27 : f32 to vector<16x128xf32>
    %c0_28 = arith.constant 0 : index
    %c0_29 = arith.constant 0 : index
    %30 = vector.load %arg7[%c0_28, %c0_29] : memref<18x128xbf16, #tpu.memory_space<vmem>>, vector<16x128xbf16>
    %c0_30 = arith.constant 0 : index
    %c0_31 = arith.constant 0 : index
    %c0_32 = arith.constant 0 : index
    %31 = vector.load %arg3[%c0_30, %c0_31, %c0_32] : memref<3x128x128xbf16, #tpu.memory_space<vmem>>, vector<1x128x128xbf16>
    %32 = vector.shape_cast %31 : vector<1x128x128xbf16> to vector<128x128xbf16>
    %cst_33 = arith.constant dense<0.000000e+00> : vector<16x128xf32>
    %33 = tpu.matmul %30, %32, %cst_33 {dimension_numbers = #tpu.dot_dimension_numbers<[1], [0], [0], [1], [0, 0, 1, 1], [], []>} : vector<16x128xbf16>, vector<128x128xbf16>, vector<16x128xf32> -> vector<16x128xf32>
    %34 = arith.addf %29, %33 : vector<16x128xf32>
    %c1_34 = arith.constant 1 : index
    %c0_35 = arith.constant 0 : index
    %35 = vector.load %arg7[%c1_34, %c0_35] : memref<18x128xbf16, #tpu.memory_space<vmem>>, vector<16x128xbf16>
    %c1_36 = arith.constant 1 : index
    %c0_37 = arith.constant 0 : index
    %c0_38 = arith.constant 0 : index
    %36 = vector.load %arg3[%c1_36, %c0_37, %c0_38] : memref<3x128x128xbf16, #tpu.memory_space<vmem>>, vector<1x128x128xbf16>
    %37 = vector.shape_cast %36 : vector<1x128x128xbf16> to vector<128x128xbf16>
    %cst_39 = arith.constant dense<0.000000e+00> : vector<16x128xf32>
    %38 = tpu.matmul %35, %37, %cst_39 {dimension_numbers = #tpu.dot_dimension_numbers<[1], [0], [0], [1], [0, 0, 1, 1], [], []>} : vector<16x128xbf16>, vector<128x128xbf16>, vector<16x128xf32> -> vector<16x128xf32>
    %39 = arith.addf %34, %38 : vector<16x128xf32>
    %c2_40 = arith.constant 2 : index
    %c0_41 = arith.constant 0 : index
    %40 = vector.load %arg7[%c2_40, %c0_41] : memref<18x128xbf16, #tpu.memory_space<vmem>>, vector<16x128xbf16>
    %c2_42 = arith.constant 2 : index
    %c0_43 = arith.constant 0 : index
    %c0_44 = arith.constant 0 : index
    %41 = vector.load %arg3[%c2_42, %c0_43, %c0_44] : memref<3x128x128xbf16, #tpu.memory_space<vmem>>, vector<1x128x128xbf16>
    %42 = vector.shape_cast %41 : vector<1x128x128xbf16> to vector<128x128xbf16>
    %cst_45 = arith.constant dense<0.000000e+00> : vector<16x128xf32>
    %43 = tpu.matmul %40, %42, %cst_45 {dimension_numbers = #tpu.dot_dimension_numbers<[1], [0], [0], [1], [0, 0, 1, 1], [], []>} : vector<16x128xbf16>, vector<128x128xbf16>, vector<16x128xf32> -> vector<16x128xf32>
    %44 = arith.addf %39, %43 : vector<16x128xf32>
    %c0_46 = arith.constant 0 : index
    %c0_47 = arith.constant 0 : index
    %45 = vector.load %arg5[%c0_46, %c0_47] : memref<1x128xf32, #tpu.memory_space<vmem>>, vector<1x128xf32>
    %46 = vector.broadcast %45 : vector<1x128xf32> to vector<16x128xf32>
    %47 = arith.addf %44, %46 : vector<16x128xf32>
    %cst_48 = arith.constant 0.000000e+00 : f32
    %48 = vector.broadcast %cst_48 : f32 to vector<16x128xf32>
    %49 = arith.maximumf %47, %48 : vector<16x128xf32>
    %50 = arith.truncf %49 : vector<16x128xf32> to vector<16x128xbf16>
    %c0_49 = arith.constant 0 : index
    %c0_50 = arith.constant 0 : index
    %c0_51 = arith.constant 0 : index
    %51 = vector.load %arg6[%c0_49, %c0_50, %c0_51] : memref<1x16x128xbf16, #tpu.memory_space<vmem>>, vector<1x16x128xbf16>
    %52 = vector.shape_cast %51 : vector<1x16x128xbf16> to vector<16x128xbf16>
    %53 = vector.shape_cast %50 : vector<16x128xbf16> to vector<1x16x128xbf16>
    tpu.vector_store %arg6[%c0_49, %c0_50, %c0_51], %53 {strides = array<i32>} : memref<1x16x128xbf16, #tpu.memory_space<vmem>>, vector<1x16x128xbf16>,
    return
  }
  func.func @transform_0(%arg0: i32) -> (i32, i32, i32) {
    %c0_i32 = arith.constant 0 : i32
    %c0_i32_0 = arith.constant 0 : i32
    %c0_i32_1 = arith.constant 0 : i32
    return %arg0, %c0_i32, %c0_i32_0 : i32, i32, i32
  }
  func.func @transform_1(%arg0: i32) -> (i32, i32, i32) {
    %c0_i32 = arith.constant 0 : i32
    %c0_i32_0 = arith.constant 0 : i32
    %c0_i32_1 = arith.constant 0 : i32
    %c0_i32_2 = arith.constant 0 : i32
    return %c0_i32, %c0_i32_0, %c0_i32_1 : i32, i32, i32
  }
  func.func @transform_2(%arg0: i32) -> (i32, i32, i32) {
    %c0_i32 = arith.constant 0 : i32
    %c0_i32_0 = arith.constant 0 : i32
    %c0_i32_1 = arith.constant 0 : i32
    %c0_i32_2 = arith.constant 0 : i32
    return %c0_i32, %c0_i32_0, %c0_i32_1 : i32, i32, i32
  }
  func.func @transform_3(%arg0: i32) -> (i32, i32) {
    %c0_i32 = arith.constant 0 : i32
    %c0_i32_0 = arith.constant 0 : i32
    %c0_i32_1 = arith.constant 0 : i32
    return %c0_i32, %c0_i32_0 : i32, i32
  }
  func.func @transform_4(%arg0: i32) -> (i32, i32) {
    %c0_i32 = arith.constant 0 : i32
    %c0_i32_0 = arith.constant 0 : i32
    %c0_i32_1 = arith.constant 0 : i32
    return %c0_i32, %c0_i32_0 : i32, i32
  }
  func.func @transform_5(%arg0: i32) -> (i32, i32, i32) {
    %c0_i32 = arith.constant 0 : i32
    %c0_i32_0 = arith.constant 0 : i32
    %c0_i32_1 = arith.constant 0 : i32
    return %arg0, %c0_i32, %c0_i32_0 : i32, i32, i32
  }
}

</mosaic_0001>

<llo_original>
// kernel: tile.13
$region0: #{tile.13}
  #allocation0 [shape = 's32[1]{0}', space=sflag, size = 0x4, scoped, tag = 'scoped memory for tile.13']
  %s0 = inlined_call_operand.vmem [shape: f32[8], index: 0, kind: input, shape index: {}]
  %s1 = inlined_call_operand.vmem [shape: f32[16,8], index: 1, kind: output, shape index: {}]
  // Predicated region
  $region2: #{tile.13} parent=0 // pred_check
    _
  $region3: #{tile.13} parent=0 // pred_check_branch
    %3 = sbr.rel (0) target = $region5
  $region4: #{tile.13} parent=0 // pred_region
    _
  $region5: #{tile.13} parent=0 // pred_fallthru
    _
  %v4 = vld [vmem:[%s0] ss:$0 sm:$0xff]
  %5 = vst [vmem:[%s1] sm:$0xff] %v4
  %s6 = scalar_lea.vmem %s1, 8
  %7 = vst [vmem:[%s6] sm:$0xff] %v4

// kernel: tile.14
$region0: #{tile.14}
  %s0 = inlined_call_operand.vmem [shape: f32[16,8], index: 0, kind: input, shape index: {}]
  %s1 = inlined_call_operand.vmem [shape: f32[1,128], index: 1, kind: output, shape index: {}]
  $region1: #{tile.14} parent=0
    #allocation0 [shape = 'u8[4096]{0}', space=vmem, size = 0x1000, scoped, tag = 'scoped mem for output reshape']
    %v2 = vld [vmem:[%s0] sm:$0x1]
    %vm3 = vcmask 64512
    %4 = vst.msk [vmem:[#allocation0] sm:$0x1] %vm3, %v2
    %s5 = scalar_lea.vmem %s0, 15
    %v6 = vld [vmem:[%s5] sm:$0x1]
    %7 = vrot.lane.b32.xlu0 %v6, 120
    %v8 = vpop.permute.xlu0 %7
    %vm9 = vcmask 1048512
    %10 = vst.msk [vmem:[#allocation0] sm:$0x1] %vm9, %v8
    %s11 = scalar_lea.vmem %s0, 14
    %v12 = vld [vmem:[%s11] sm:$0x1]
    %13 = vrot.lane.b32.xlu0 %v12, 112
    %v14 = vpop.permute.xlu0 %13
    %vm15 = vcmask 982912
    %16 = vst.msk [vmem:[#allocation0] sm:$0x1] %vm15, %v14
    %s17 = scalar_lea.vmem %s0, 13
    %v18 = vld [vmem:[%s17] sm:$0x1]
    %19 = vrot.lane.b32.xlu0 %v18, 104
    %v20 = vpop.permute.xlu0 %19
    %vm21 = vcmask 917312
    %22 = vst.msk [vmem:[#allocation0] sm:$0x1] %vm21, %v20
    %s23 = scalar_lea.vmem %s0, 12
    %v24 = vld [vmem:[%s23] sm:$0x1]
    %25 = vrot.lane.b32.xlu0 %v24, 96
    %v26 = vpop.permute.xlu0 %25
    %vm27 = vcmask 851712
    %28 = vst.msk [vmem:[#allocation0] sm:$0x1] %vm27, %v26
    %s29 = scalar_lea.vmem %s0, 11
    %v30 = vld [vmem:[%s29] sm:$0x1]
    %31 = vrot.lane.b32.xlu0 %v30, 88
    %v32 = vpop.permute.xlu0 %31
    %vm33 = vcmask 786112
    %34 = vst.msk [vmem:[#allocation0] sm:$0x1] %vm33, %v32
    %s35 = scalar_lea.vmem %s0, 10
    %v36 = vld [vmem:[%s35] sm:$0x1]
    %37 = vrot.lane.b32.xlu0 %v36, 80
    %v38 = vpop.permute.xlu0 %37
    %vm39 = vcmask 720512
    %40 = vst.msk [vmem:[#allocation0] sm:$0x1] %vm39, %v38
    %s41 = scalar_lea.vmem %s0, 9
    %v42 = vld [vmem:[%s41] sm:$0x1]
    %43 = vrot.lane.b32.xlu0 %v42, 72
    %v44 = vpop.permute.xlu0 %43
    %vm45 = vcmask 654912
    %46 = vst.msk [vmem:[#allocation0] sm:$0x1] %vm45, %v44
    %s47 = scalar_lea.vmem %s0, 8
    %v48 = vld [vmem:[%s47] sm:$0x1]
    %49 = vrot.lane.b32.xlu0 %v48, 64
    %v50 = vpop.permute.xlu0 %49
    %vm51 = vcmask 589312
    %52 = vst.msk [vmem:[#allocation0] sm:$0x1] %vm51, %v50
    %s53 = scalar_lea.vmem %s0, 7
    %v54 = vld [vmem:[%s53] sm:$0x1]
    %55 = vrot.lane.b32.xlu0 %v54, 56
    %v56 = vpop.permute.xlu0 %55
    %vm57 = vcmask 523712
    %58 = vst.msk [vmem:[#allocation0] sm:$0x1] %vm57, %v56
    %s59 = scalar_lea.vmem %s0, 6
    %v60 = vld [vmem:[%s59] sm:$0x1]
    %61 = vrot.lane.b32.xlu0 %v60, 48
    %v62 = vpop.permute.xlu0 %61
    %vm63 = vcmask 458112
    %64 = vst.msk [vmem:[#allocation0] sm:$0x1] %vm63, %v62
    %s65 = scalar_lea.vmem %s0, 5
    %v66 = vld [vmem:[%s65] sm:$0x1]
    %67 = vrot.lane.b32.xlu0 %v66, 40
    %v68 = vpop.permute.xlu0 %67
    %vm69 = vcmask 392512
    %70 = vst.msk [vmem:[#allocation0] sm:$0x1] %vm69, %v68
    %s71 = scalar_lea.vmem %s0, 4
    %v72 = vld [vmem:[%s71] sm:$0x1]
    %73 = vrot.lane.b32.xlu0 %v72, 32
    %v74 = vpop.permute.xlu0 %73
    %vm75 = vcmask 326912
    %76 = vst.msk [vmem:[#allocation0] sm:$0x1] %vm75, %v74
    %s77 = scalar_lea.vmem %s0, 3
    %v78 = vld [vmem:[%s77] sm:$0x1]
    %79 = vrot.lane.b32.xlu0 %v78, 24
    %v80 = vpop.permute.xlu0 %79
    %vm81 = vcmask 261312
    %82 = vst.msk [vmem:[#allocation0] sm:$0x1] %vm81, %v80
    %s83 = scalar_lea.vmem %s0, 2
    %v84 = vld [vmem:[%s83] sm:$0x1]
    %85 = vrot.lane.b32.xlu0 %v84, 16
    %v86 = vpop.permute.xlu0 %85
    %vm87 = vcmask 195712
    %88 = vst.msk [vmem:[#allocation0] sm:$0x1] %vm87, %v86
    %s89 = scalar_lea.vmem %s0, 1
    %v90 = vld [vmem:[%s89] sm:$0x1]
    %91 = vrot.lane.b32.xlu0 %v90, 8
    %v92 = vpop.permute.xlu0 %91
    %vm93 = vcmask 130112
    %94 = vst.msk [vmem:[#allocation0] sm:$0x1] %vm93, %v92
    %s96 = sshllo.u32 0, 1
    %v98 = vld [vmem:[#allocation0] sm:%s96]
    %s99 = sshllo.u32 0, 1
    %100 = vst [vmem:[%s1] sm:%s99] %v98

// kernel: residual_block_forward.1
$region0: #{residual_block_forward.1}
  #allocation0 [shape = 'u32[]', space=smem, size = 0x4, offset = 0x4, fixed_abs, tag = 'smem constant byte address 0x4 - core index']
  #allocation1 [shape = 'u32[144,128]{1,0:T(1,128)}', space=vmem, size = 0x12000, scoped, tag = 'internal scratch']
  #allocation2 [shape = 'bf16[18,128]{1,0:T(8,128)(2,1)}', space=vmem, size = 0x1800, scoped, tag = 'scratch operand']
  %s0 = inlined_call_operand.vmem [shape: bf16[2,18,64], index: 0, kind: input, shape index: {}]
  %s1 = inlined_call_operand.vmem [shape: bf16[3,64,128], index: 1, kind: input, shape index: {}]
  %s2 = inlined_call_operand.vmem [shape: bf16[3,128,128], index: 2, kind: input, shape index: {}]
  %s3 = inlined_call_operand.vmem [shape: f32[1,128], index: 3, kind: input, shape index: {}]
  %s4 = inlined_call_operand.vmem [shape: f32[1,128], index: 4, kind: input, shape index: {}]
  %s5 = inlined_call_operand.vmem [shape: bf16[2,16,128], index: 5, kind: output, shape index: {}]
  %s6 = sld [smem:[#allocation0]]
  $region53: #{residual_block_forward.1} parent=0
    _
  %s8 = ssub.s32 1, %s6
  %s9 = scalar_select 0, %s8, %s6
  loop: start=0, step=1, limit=4
  $region2: #{residual_block_forward.1} parent=0 // loop_pre_header
    _
  $region3: #{residual_block_forward.1} parent=0 // loop_header
    %s11 = sphi 0, %s15
    %p12 = scmp.ge.s32.totalorder %s11, 4
    %s21 = sphi 0, %s23
    %s24 = sphi 0, %s21
    %s25 = sphi 0, %s24
    %s41 = sphi 0, %s25
    %s45 = sphi 0, %s45
    %s47 = sphi 0, %s45
    %s48 = sphi 0, %s47
    %s62 = sphi 0, %s48
    %s66 = sphi 0, %s66
    %s68 = sphi 0, %s66
    %s69 = sphi 0, %s68
    %s83 = sphi 0, %s69
    %s87 = sphi 0, %s87
    %s89 = sphi 0, %s87
    %s90 = sphi 0, %s89
    %s104 = sphi 0, %s90
    %s108 = sphi 0, %s108
    %s110 = sphi 0, %s108
    %s111 = sphi 0, %s110
    %s125 = sphi 0, %s111
    %s131 = sphi 0, %s133
    %s134 = sphi 0, %s131
    %s135 = sphi 0, %s134
    %s151 = sphi 0, %s135
  $region4: #{residual_block_forward.1} parent=0 // loop_header_branch
    %14 = sbr.rel (%p12) target = $region8
  $region5: #{residual_block_forward.1} parent=0 // loop_body
    %s16 = ssub.s32 %s11, 1
    %s17 = ssub.s32 %s11, 2
    %s18 = sadd.s32 %s11, 1
    %s19 = ssub.s32 %s11, %s18
    %p20 = scmp.eq.s32.totalorder %s19, 0
    %s22 = sadd.s32 %s21, 1
    %s23 = scalar_select %p20, %s21, %s22
    %p26 = pneg %p20
    %p27 = scmp.eq.s32.totalorder %s11, 1
    %p28 = por %p26, %p27
    %p29 = scmp.ne.s32.totalorder %s21, %s24
    %p30 = scmp.eq.s32.totalorder %s11, 0
    %p31 = por %p29, %p30
    %p32 = scmp.ne.s32.totalorder %s21, %s24
    %p33 = scmp.eq.s32.totalorder %s16, 1
    %p34 = por %p32, %p33
    %p35 = scmp.ne.s32.totalorder %s24, %s25
    %p36 = scmp.eq.s32.totalorder %s16, 0
    %p37 = por %p35, %p36
    %p38 = scmp.ne.s32.totalorder %s24, %s25
    %p39 = scmp.eq.s32.totalorder %s17, 1
    %p40 = por %p38, %p39
    %p42 = scmp.ne.s32.totalorder %s25, %s41
    %p43 = scmp.eq.s32.totalorder %s17, 0
    %p44 = por %p42, %p43
    %s46 = sadd.s32 %s45, 1
    %p49 = scmp.eq.s32.totalorder %s11, 1
    %p50 = scmp.ne.s32.totalorder %s45, %s47
    %p51 = scmp.eq.s32.totalorder %s11, 0
    %p52 = por %p50, %p51
    %p53 = scmp.ne.s32.totalorder %s45, %s47
    %p54 = scmp.eq.s32.totalorder %s16, 1
    %p55 = por %p53, %p54
    %p56 = scmp.ne.s32.totalorder %s47, %s48
    %p57 = scmp.eq.s32.totalorder %s16, 0
    %p58 = por %p56, %p57
    %p59 = scmp.ne.s32.totalorder %s47, %s48
    %p60 = scmp.eq.s32.totalorder %s17, 1
    %p61 = por %p59, %p60
    %p63 = scmp.ne.s32.totalorder %s48, %s62
    %p64 = scmp.eq.s32.totalorder %s17, 0
    %p65 = por %p63, %p64
    %s67 = sadd.s32 %s66, 1
    %p70 = scmp.eq.s32.totalorder %s11, 1
    %p71 = scmp.ne.s32.totalorder %s66, %s68
    %p72 = scmp.eq.s32.totalorder %s11, 0
    %p73 = por %p71, %p72
    %p74 = scmp.ne.s32.totalorder %s66, %s68
    %p75 = scmp.eq.s32.totalorder %s16, 1
    %p76 = por %p74, %p75
    %p77 = scmp.ne.s32.totalorder %s68, %s69
    %p78 = scmp.eq.s32.totalorder %s16, 0
    %p79 = por %p77, %p78
    %p80 = scmp.ne.s32.totalorder %s68, %s69
    %p81 = scmp.eq.s32.totalorder %s17, 1
    %p82 = por %p80, %p81
    %p84 = scmp.ne.s32.totalorder %s69, %s83
    %p85 = scmp.eq.s32.totalorder %s17, 0
    %p86 = por %p84, %p85
    %s88 = sadd.s32 %s87, 1
    %p91 = scmp.eq.s32.totalorder %s11, 1
    %p92 = scmp.ne.s32.totalorder %s87, %s89
    %p93 = scmp.eq.s32.totalorder %s11, 0
    %p94 = por %p92, %p93
    %p95 = scmp.ne.s32.totalorder %s87, %s89
    %p96 = scmp.eq.s32.totalorder %s16, 1
    %p97 = por %p95, %p96
    %p98 = scmp.ne.s32.totalorder %s89, %s90
    %p99 = scmp.eq.s32.totalorder %s16, 0
    %p100 = por %p98, %p99
    %p101 = scmp.ne.s32.totalorder %s89, %s90
    %p102 = scmp.eq.s32.totalorder %s17, 1
    %p103 = por %p101, %p102
    %p105 = scmp.ne.s32.totalorder %s90, %s104
    %p106 = scmp.eq.s32.totalorder %s17, 0
    %p107 = por %p105, %p106
    %s109 = sadd.s32 %s108, 1
    %p112 = scmp.eq.s32.totalorder %s11, 1
    %p113 = scmp.ne.s32.totalorder %s108, %s110
    %p114 = scmp.eq.s32.totalorder %s11, 0
    %p115 = por %p113, %p114
    %p116 = scmp.ne.s32.totalorder %s108, %s110
    %p117 = scmp.eq.s32.totalorder %s16, 1
    %p118 = por %p116, %p117
    %p119 = scmp.ne.s32.totalorder %s110, %s111
    %p120 = scmp.eq.s32.totalorder %s16, 0
    %p121 = por %p119, %p120
    %p122 = scmp.ne.s32.totalorder %s110, %s111
    %p123 = scmp.eq.s32.totalorder %s17, 1
    %p124 = por %p122, %p123
    %p126 = scmp.ne.s32.totalorder %s111, %s125
    %p127 = scmp.eq.s32.totalorder %s17, 0
    %p128 = por %p126, %p127
    %s129 = ssub.s32 %s11, %s18
    %p130 = scmp.eq.s32.totalorder %s129, 0
    %s132 = sadd.s32 %s131, 1
    %s133 = scalar_select %p130, %s131, %s132
    %p136 = pneg %p130
    %p137 = scmp.eq.s32.totalorder %s11, 1
    %p138 = por %p136, %p137
    %p139 = scmp.ne.s32.totalorder %s131, %s134
    %p140 = scmp.eq.s32.totalorder %s11, 0
    %p141 = por %p139, %p140
    %p142 = scmp.ne.s32.totalorder %s131, %s134
    %p143 = scmp.eq.s32.totalorder %s16, 1
    %p144 = por %p142, %p143
    %p145 = scmp.ne.s32.totalorder %s134, %s135
    %p146 = scmp.eq.s32.totalorder %s16, 0
    %p147 = por %p145, %p146
    %p148 = scmp.ne.s32.totalorder %s134, %s135
    %p149 = scmp.eq.s32.totalorder %s17, 1
    %p150 = por %p148, %p149
    %p152 = scmp.ne.s32.totalorder %s135, %s151
    %p153 = scmp.eq.s32.totalorder %s17, 0
    %p154 = por %p152, %p153
    %p155 = scmp.le.s32.totalorder 1, %s11
    %p156 = scmp.lt.s32.totalorder %s11, 3
    %p157 = pnand %p155, %p156
    %p158 = pneg %p157
    // Predicated region
    $region9: #{residual_block_forward.1} parent=5 // pred_check
      _
    $region10: #{residual_block_forward.1} parent=5 // pred_check_branch
      %160 = sbr.rel (%p157) target = $region12
    $region11: #{residual_block_forward.1} parent=5 // pred_region
      %s161 = ssub.s32 %s11, 1
      // Predicated region
      $region13: #{residual_block_forward.1} parent=11 // pred_check
        %p162 = pneg %p58
      $region14: #{residual_block_forward.1} parent=11 // pred_check_branch
        %164 = sbr.rel (%p162) target = $region16
      $region15: #{residual_block_forward.1} parent=11 // pred_region
        _
      $region16: #{residual_block_forward.1} parent=11 // pred_fallthru
        _
      // Predicated region
      $region17: #{residual_block_forward.1} parent=11 // pred_check
        %p165 = pneg %p79
      $region18: #{residual_block_forward.1} parent=11 // pred_check_branch
        %167 = sbr.rel (%p165) target = $region20
      $region19: #{residual_block_forward.1} parent=11 // pred_region
        _
      $region20: #{residual_block_forward.1} parent=11 // pred_fallthru
        _
      // Predicated region
      $region21: #{residual_block_forward.1} parent=11 // pred_check
        %p168 = pneg %p100
      $region22: #{residual_block_forward.1} parent=11 // pred_check_branch
        %170 = sbr.rel (%p168) target = $region24
      $region23: #{residual_block_forward.1} parent=11 // pred_region
        _
      $region24: #{residual_block_forward.1} parent=11 // pred_fallthru
        _
      // Predicated region
      $region25: #{residual_block_forward.1} parent=11 // pred_check
        %p171 = pneg %p121
      $region26: #{residual_block_forward.1} parent=11 // pred_check_branch
        %173 = sbr.rel (%p171) target = $region28
      $region27: #{residual_block_forward.1} parent=11 // pred_region
        _
      $region28: #{residual_block_forward.1} parent=11 // pred_fallthru
        _
    $region12: #{residual_block_forward.1} parent=5 // pred_fallthru
      _
    %p174 = scmp.lt.s32.totalorder %s11, 2
    // Predicated region
    $region29: #{residual_block_forward.1} parent=5 // pred_check
      %p175 = pneg %p174
    $region30: #{residual_block_forward.1} parent=5 // pred_check_branch
      %177 = sbr.rel (%p175) target = $region32
    $region31: #{residual_block_forward.1} parent=5 // pred_region
      // Predicated region
      $region33: #{residual_block_forward.1} parent=31 // pred_check
        %p178 = pneg %p31
      $region34: #{residual_block_forward.1} parent=31 // pred_check_branch
        %180 = sbr.rel (%p178) target = $region36
      $region35: #{residual_block_forward.1} parent=31 // pred_region
        %p181 = scmp.lt.s32.totalorder %s11, 1
        %s182 = scalar_select %p181, %s11, 1
        %s183 = smul.addr %s182, 3
        %s184 = smul.addr %s183, 4
        %s185 = scalar_lea.vmem %s0, %s184
      $region36: #{residual_block_forward.1} parent=31 // pred_fallthru
        _
    $region32: #{residual_block_forward.1} parent=5 // pred_fallthru
      _
    %p186 = scmp.le.s32.totalorder 1, %s11
    %p187 = scmp.lt.s32.totalorder %s11, 3
    %p188 = pnand %p186, %p187
    %p189 = pneg %p188
    // Predicated region
    $region37: #{residual_block_forward.1} parent=5 // pred_check
      _
    $region38: #{residual_block_forward.1} parent=5 // pred_check_branch
      %191 = sbr.rel (%p188) target = $region40
    $region39: #{residual_block_forward.1} parent=5 // pred_region
      %s192 = ssub.s32 %s11, 1
      %p193 = scmp.lt.s32.totalorder %s16, 1
      %s194 = scalar_select %p193, %s16, 1
      %s195 = smul.addr %s194, 3
      %s196 = smul.addr %s195, 4
      %s197 = scalar_lea.vmem %s0, %s196
      %p198 = pneg %p37
      %p199 = pneg %p34
      %p200 = pneg %p58
      %p201 = pneg %p55
      %p202 = pneg %p79
      %p203 = pneg %p76
      %p204 = pneg %p100
      %p205 = pneg %p97
      %p206 = pneg %p121
      %p207 = pneg %p118
      %p208 = pneg %p147
      %p209 = pneg %p144
      %p210 = scmp.lt.s32.totalorder %s16, 1
      %s211 = scalar_select %p210, %s16, 1
      %s212 = smul.addr %s211, 2
      %s213 = smul.addr %s212, 4
      %s214 = scalar_lea.vmem %s5, %s213
      %p215 = scmp.lt.s32.totalorder %s16, 1
      %s216 = scalar_select %p215, %s16, 1
      %s217 = smul.addr %s216, 3
      %s218 = smul.addr %s217, 4
      %s219 = scalar_lea.vmem %s0, %s218
      %p220 = scmp.lt.s32.totalorder %s16, 1
      %s221 = scalar_select %p220, %s16, 1
      %s222 = smul.addr %s221, 2
      %s223 = smul.addr %s222, 4
      %s224 = scalar_lea.vmem %s5, %s223
      %v226 = vld [vmem:[%s219] sm:$0xf]
      %v227 = vld [vmem:[%s219 + $0x4] sm:$0xf]
      %v228 = vld [vmem:[%s1] sm:$0xf]
      %v229 = vld [vmem:[%s1 + $0x4] sm:$0xf]
      %v230 = vld [vmem:[%s1 + $0x8] sm:$0xf]
      %v231 = vld [vmem:[%s1 + $0xc] sm:$0xf]
      %v232 = vld [vmem:[%s1 + $0x10] sm:$0xf]
      %v233 = vld [vmem:[%s1 + $0x14] sm:$0xf]
      %v234 = vld [vmem:[%s1 + $0x18] sm:$0xf]
      %v235 = vld [vmem:[%s1 + $0x1c] sm:$0xf]
      %v236 = vld [vmem:[%s219 + $0x8] sm:$0x1]
      %s237 = scalar_lea.vmem %s1, 32
      %v238 = vld [vmem:[%s237] sm:$0xf]
      %v239 = vld [vmem:[%s237 + $0x4] sm:$0xf]
      %v240 = vld [vmem:[%s237 + $0x8] sm:$0xf]
      %v241 = vld [vmem:[%s237 + $0xc] sm:$0xf]
      %v242 = vld [vmem:[%s237 + $0x10] sm:$0xf]
      %v243 = vld [vmem:[%s237 + $0x14] sm:$0xf]
      %v244 = vld [vmem:[%s237 + $0x18] sm:$0xf]
      %v245 = vld [vmem:[%s237 + $0x1c] sm:$0xf]
      %v249 = vunpack.c.l.b16 %v226
      %v250 = vunpack.c.l.b16 %v227
      %v251 = vunpack.c.l.b16 %v236
      %v252 = vpack.c.b16 %v250, %v249
      %v253 = vpack.c.b16 %v251, %v251
      %vm254 = vsmask.f32 7424
      %v256 = vshrl.u32 %v252, 16
      %v258 = vshll.u32 %v252, 16
      %v260 = vrot.slane %v258, 1
      %v261 = vor.u32 %v256, %v260
      %v263 = vshll.u32 %v253, 16
      %v265 = vrot.slane %v263, 1
      %v266 = vsel %vm254, %v261, %v265
      %v275 = vunpack.c.l.b16 %v238
      %v276 = vunpack.c.l.b16 %v239
      %v277 = vunpack.c.l.b16 %v240
      %v278 = vunpack.c.l.b16 %v241
      %v279 = vunpack.c.l.b16 %v242
      %v280 = vunpack.c.l.b16 %v243
      %v281 = vunpack.c.l.b16 %v244
      %v282 = vunpack.c.l.b16 %v245
      %v283 = vpack.c.b16 %v276, %v275
      %v284 = vpack.c.b16 %v278, %v277
      %v285 = vpack.c.b16 %v280, %v279
      %v286 = vpack.c.b16 %v282, %v281
      %vm291 = vcmask 523264
      %v293 = vsel %vm291, %v266, 0
      %295 = vmatprep.subr.bf16.mxu0 0
      %296 = vmatpush1.bf16.msra.mxu0 %v283
      %297 = vmatprep.subr.bf16.mxu0 0
      %298 = vmatpush1.bf16.msra.mxu0 %v284
      %299 = vmatprep.subr.bf16.mxu0 0
      %300 = vmatpush1.bf16.msra.mxu0 %v285
      %301 = vmatprep.subr.bf16.mxu0 0
      %302 = vmatpush1.bf16.msra.mxu0 %v286
      %303 = vmatprep.subr.bf16.mxu0 0
      %304 = vmatpush1.bf16.msra.mxu0 0
      %305 = vmatprep.subr.bf16.mxu0 0
      %306 = vmatpush1.bf16.msra.mxu0 0
      %307 = vmatprep.subr.bf16.mxu0 0
      %308 = vmatpush1.bf16.msra.mxu0 0
      %309 = vmatprep.subr.bf16.mxu0 0
      %310 = vmatpush1.bf16.msra.mxu0 0
      %311 = vmatprep.subr.bf16.mxu0 0
      %312 = vmatpush1.bf16.msra.mxu0 0
      %313 = vmatprep.subr.bf16.mxu0 0
      %314 = vmatpush1.bf16.msra.mxu0 0
      %315 = vmatprep.subr.bf16.mxu0 0
      %316 = vmatpush1.bf16.msra.mxu0 0
      %317 = vmatprep.subr.bf16.mxu0 0
      %318 = vmatpush1.bf16.msra.mxu0 0
      %319 = vmatprep.subr.bf16.mxu0 0
      %320 = vmatpush1.bf16.msra.mxu0 0
      %321 = vmatprep.subr.bf16.mxu0 0
      %322 = vmatpush1.bf16.msra.mxu0 0
      %323 = vmatprep.subr.bf16.mxu0 0
      %324 = vmatpush1.bf16.msra.mxu0 0
      %325 = vmatprep.subr.bf16.mxu0 0
      %326 = vmatpush1.bf16.msra.mxu0 0
      %327 = vmatprep.mubr.bf16.mxu0 0
      %328 = vmatmul.mubr.bf16.gmra.mrb[0].mxu0 %v293
      %v329 = vpop.f32.mrb[0].mxu0
      %v330 = vadd.f32 0.0, %v329
      %v331 = vpop.f32.mrb[0].mxu0
      %v332 = vpop.f32.mrb[0].mxu0
      %v333 = vadd.f32 0.0, %v332
      %v334 = vpop.f32.mrb[0].mxu0
      %335 = vdwg.mxu0
      %v344 = vunpack.c.l.b16 %v228
      %v345 = vunpack.c.l.b16 %v229
      %v346 = vunpack.c.l.b16 %v230
      %v347 = vunpack.c.l.b16 %v231
      %v348 = vunpack.c.l.b16 %v232
      %v349 = vunpack.c.l.b16 %v233
      %v350 = vunpack.c.l.b16 %v234
      %v351 = vunpack.c.l.b16 %v235
      %v352 = vpack.c.b16 %v345, %v344
      %v353 = vpack.c.b16 %v347, %v346
      %v354 = vpack.c.b16 %v349, %v348
      %v355 = vpack.c.b16 %v351, %v350
      %v360 = vsel %vm291, %v252, 0
      %362 = vmatprep.subr.bf16.mxu0 0
      %363 = vmatpush1.bf16.msra.mxu0 %v352
      %364 = vmatprep.subr.bf16.mxu0 0
      %365 = vmatpush1.bf16.msra.mxu0 %v353
      %366 = vmatprep.subr.bf16.mxu0 0
      %367 = vmatpush1.bf16.msra.mxu0 %v354
      %368 = vmatprep.subr.bf16.mxu0 0
      %369 = vmatpush1.bf16.msra.mxu0 %v355
      %370 = vmatprep.subr.bf16.mxu0 0
      %371 = vmatpush1.bf16.msra.mxu0 0
      %372 = vmatprep.subr.bf16.mxu0 0
      %373 = vmatpush1.bf16.msra.mxu0 0
      %374 = vmatprep.subr.bf16.mxu0 0
      %375 = vmatpush1.bf16.msra.mxu0 0
      %376 = vmatprep.subr.bf16.mxu0 0
      %377 = vmatpush1.bf16.msra.mxu0 0
      %378 = vmatprep.subr.bf16.mxu0 0
      %379 = vmatpush1.bf16.msra.mxu0 0
      %380 = vmatprep.subr.bf16.mxu0 0
      %381 = vmatpush1.bf16.msra.mxu0 0
      %382 = vmatprep.subr.bf16.mxu0 0
      %383 = vmatpush1.bf16.msra.mxu0 0
      %384 = vmatprep.subr.bf16.mxu0 0
      %385 = vmatpush1.bf16.msra.mxu0 0
      %386 = vmatprep.subr.bf16.mxu0 0
      %387 = vmatpush1.bf16.msra.mxu0 0
      %388 = vmatprep.subr.bf16.mxu0 0
      %389 = vmatpush1.bf16.msra.mxu0 0
      %390 = vmatprep.subr.bf16.mxu0 0
      %391 = vmatpush1.bf16.msra.mxu0 0
      %392 = vmatprep.subr.bf16.mxu0 0
      %393 = vmatpush1.bf16.msra.mxu0 0
      %394 = vmatprep.mubr.bf16.mxu0 0
      %395 = vmatmul.mubr.bf16.gmra.mrb[0].mxu0 %v360
      %v396 = vpop.f32.mrb[0].mxu0
      %v397 = vadd.f32 %v330, %v396
      %v398 = vpop.f32.mrb[0].mxu0
      %v399 = vpop.f32.mrb[0].mxu0
      %v400 = vadd.f32 %v333, %v399
      %v401 = vpop.f32.mrb[0].mxu0
      %402 = vdwg.mxu0
      %v403 = vld [vmem:[%s219] sm:$0xe]
      %s404 = scalar_lea.vmem %s1, 64
      %v405 = vld [vmem:[%s404] sm:$0xf]
      %v406 = vld [vmem:[%s404 + $0x4] sm:$0xf]
      %v407 = vld [vmem:[%s404 + $0x8] sm:$0xf]
      %v408 = vld [vmem:[%s404 + $0xc] sm:$0xf]
      %v409 = vld [vmem:[%s404 + $0x10] sm:$0xf]
      %v410 = vld [vmem:[%s404 + $0x14] sm:$0xf]
      %v411 = vld [vmem:[%s404 + $0x18] sm:$0xf]
      %v412 = vld [vmem:[%s404 + $0x1c] sm:$0xf]
      %v414 = vunpack.c.l.b16 %v403
      %v415 = vpack.c.b16 %v250, %v414
      %vm416 = vcmask 1046528
      %v417 = vrot.slane %v415, 1
      %v418 = vrot.slane %v253, 1
      %v419 = vsel %vm416, %v417, %v418
      %v428 = vunpack.c.l.b16 %v405
      %v429 = vunpack.c.l.b16 %v406
      %v430 = vunpack.c.l.b16 %v407
      %v431 = vunpack.c.l.b16 %v408
      %v432 = vunpack.c.l.b16 %v409
      %v433 = vunpack.c.l.b16 %v410
      %v434 = vunpack.c.l.b16 %v411
      %v435 = vunpack.c.l.b16 %v412
      %v436 = vpack.c.b16 %v429, %v428
      %v437 = vpack.c.b16 %v431, %v430
      %v438 = vpack.c.b16 %v433, %v432
      %v439 = vpack.c.b16 %v435, %v434
      %v445 = vsel %vm291, %v419, 0
      %447 = vmatprep.subr.bf16.mxu0 0
      %448 = vmatpush1.bf16.msra.mxu0 %v436
      %449 = vmatprep.subr.bf16.mxu0 0
      %450 = vmatpush1.bf16.msra.mxu0 %v437
      %451 = vmatprep.subr.bf16.mxu0 0
      %452 = vmatpush1.bf16.msra.mxu0 %v438
      %453 = vmatprep.subr.bf16.mxu0 0
      %454 = vmatpush1.bf16.msra.mxu0 %v439
      %455 = vmatprep.subr.bf16.mxu0 0
      %456 = vmatpush1.bf16.msra.mxu0 0
      %457 = vmatprep.subr.bf16.mxu0 0
      %458 = vmatpush1.bf16.msra.mxu0 0
      %459 = vmatprep.subr.bf16.mxu0 0
      %460 = vmatpush1.bf16.msra.mxu0 0
      %461 = vmatprep.subr.bf16.mxu0 0
      %462 = vmatpush1.bf16.msra.mxu0 0
      %463 = vmatprep.subr.bf16.mxu0 0
      %464 = vmatpush1.bf16.msra.mxu0 0
      %465 = vmatprep.subr.bf16.mxu0 0
      %466 = vmatpush1.bf16.msra.mxu0 0
      %467 = vmatprep.subr.bf16.mxu0 0
      %468 = vmatpush1.bf16.msra.mxu0 0
      %469 = vmatprep.subr.bf16.mxu0 0
      %470 = vmatpush1.bf16.msra.mxu0 0
      %471 = vmatprep.subr.bf16.mxu0 0
      %472 = vmatpush1.bf16.msra.mxu0 0
      %473 = vmatprep.subr.bf16.mxu0 0
      %474 = vmatpush1.bf16.msra.mxu0 0
      %475 = vmatprep.subr.bf16.mxu0 0
      %476 = vmatpush1.bf16.msra.mxu0 0
      %477 = vmatprep.subr.bf16.mxu0 0
      %478 = vmatpush1.bf16.msra.mxu0 0
      %479 = vmatprep.mubr.bf16.mxu0 0
      %480 = vmatmul.mubr.bf16.gmra.mrb[0].mxu0 %v445
      %v481 = vpop.f32.mrb[0].mxu0
      %v482 = vadd.f32 0.0, %v481
      %v483 = vpop.f32.mrb[0].mxu0
      %v484 = vpop.f32.mrb[0].mxu0
      %v485 = vadd.f32 0.0, %v484
      %v486 = vpop.f32.mrb[0].mxu0
      %487 = vdwg.mxu0
      %v488 = vadd.f32 %v397, %v482
      %v489 = vadd.f32 %v400, %v485
      %v490 = vld [vmem:[%s3] sm:$0x1]
      %v492 = vlaneseq
      %v493 = vshrl.u32 %v492, 7
      %v494 = vsub.s32 0, %v493
      %v495 = vrot.slane %v490, %v494
      %v497 = vadd.f32 %v488, %v495
      %v498 = vadd.f32 %v489, %v495
      %v499 = vmax.f32 %v497, 0.0
      %v500 = vmax.f32 %v498, 0.0
      %vm501 = vcmask 1040384
      %vm502 = vsmask.f32 256
      %vm503 = vmand %vm501, %vm502
      %v504 = vld [vmem:[#allocation2] sm:$0x1]
      %v505 = vsel %vm503, 0, %v504
      %506 = vst [vmem:[#allocation2] sm:$0x1] %v505
      %vm507 = vsmask.f32 7938
      %vm508 = vmand %vm501, %vm507
      %v509 = vld [vmem:[#allocation2 + $0x8] sm:$0x1]
      %v510 = vsel %vm508, 0, %v509
      %511 = vst [vmem:[#allocation2 + $0x8] sm:$0x1] %v510
      %v512 = vpack.c.bf16 %v500, %v499
      %v514 = vunpack.c.l.b16 %v512
      %v515 = vunpack.c.h.b16 %v512
      %v516 = vpack.c.b16 %v514, %v514
      %v517 = vpack.c.b16 %v515, %v515
      %vm518 = vsmask.f32 4368
      %vm519 = vmor %vm502, %vm518
      %v521 = vshrl.u32 %v516, 16
      %v523 = vrot.slane %v521, 7
      %v524 = vshll.u32 %v516, 16
      %v526 = vor.u32 %v523, %v524
      %v527 = vrot.slane %v523, 4
      %v529 = vshrl.u32 %v517, 16
      %v531 = vrot.slane %v529, 7
      %v532 = vshll.u32 %v517, 16
      %v534 = vor.u32 %v531, %v532
      %v535 = vsel %vm519, %v527, %v534
      %v536 = vrot.slane %v531, 4
      %vm540 = vcmask 1043456
      %vm541 = vmand %vm540, %vm507
      %v542 = vld [vmem:[#allocation2] sm:$0xf]
      %v543 = vsel %vm541, %v526, %v542
      %544 = vst [vmem:[#allocation2] sm:$0xf] %v543
      %545 = vst [vmem:[#allocation2 + $0x4] sm:$0xf] %v535
      %v546 = vld [vmem:[#allocation2 + $0x8] sm:$0x1]
      %v547 = vsel %vm503, %v536, %v546
      %548 = vst [vmem:[#allocation2 + $0x8] sm:$0x1] %v547
      %v549 = vld [vmem:[#allocation2] sm:$0xf]
      %v550 = vld [vmem:[#allocation2 + $0x4] sm:$0xf]
      %v551 = vld [vmem:[%s2] sm:$0xf]
      %v552 = vld [vmem:[%s2 + $0x4] sm:$0xf]
      %v553 = vld [vmem:[%s2 + $0x8] sm:$0xf]
      %v554 = vld [vmem:[%s2 + $0xc] sm:$0xf]
      %v555 = vld [vmem:[%s2 + $0x10] sm:$0xf]
      %v556 = vld [vmem:[%s2 + $0x14] sm:$0xf]
      %v557 = vld [vmem:[%s2 + $0x18] sm:$0xf]
      %v558 = vld [vmem:[%s2 + $0x1c] sm:$0xf]
      %v559 = vld [vmem:[%s2 + $0x20] sm:$0xf]
      %v560 = vld [vmem:[%s2 + $0x24] sm:$0xf]
      %v561 = vld [vmem:[%s2 + $0x28] sm:$0xf]
      %v562 = vld [vmem:[%s2 + $0x2c] sm:$0xf]
      %v563 = vld [vmem:[%s2 + $0x30] sm:$0xf]
      %v564 = vld [vmem:[%s2 + $0x34] sm:$0xf]
      %v565 = vld [vmem:[%s2 + $0x38] sm:$0xf]
      %v566 = vld [vmem:[%s2 + $0x3c] sm:$0xf]
      %v567 = vld [vmem:[#allocation2 + $0x8] sm:$0x1]
      %s568 = scalar_lea.vmem %s2, 64
      %v569 = vld [vmem:[%s568] sm:$0xf]
      %v570 = vld [vmem:[%s568 + $0x4] sm:$0xf]
      %v571 = vld [vmem:[%s568 + $0x8] sm:$0xf]
      %v572 = vld [vmem:[%s568 + $0xc] sm:$0xf]
      %v573 = vld [vmem:[%s568 + $0x10] sm:$0xf]
      %v574 = vld [vmem:[%s568 + $0x14] sm:$0xf]
      %v575 = vld [vmem:[%s568 + $0x18] sm:$0xf]
      %v576 = vld [vmem:[%s568 + $0x1c] sm:$0xf]
      %v577 = vld [vmem:[%s568 + $0x20] sm:$0xf]
      %v578 = vld [vmem:[%s568 + $0x24] sm:$0xf]
      %v579 = vld [vmem:[%s568 + $0x28] sm:$0xf]
      %v580 = vld [vmem:[%s568 + $0x2c] sm:$0xf]
      %v581 = vld [vmem:[%s568 + $0x30] sm:$0xf]
      %v582 = vld [vmem:[%s568 + $0x34] sm:$0xf]
      %v583 = vld [vmem:[%s568 + $0x38] sm:$0xf]
      %v584 = vld [vmem:[%s568 + $0x3c] sm:$0xf]
      %v588 = vunpack.c.l.b16 %v549
      %v589 = vunpack.c.l.b16 %v550
      %v590 = vunpack.c.l.b16 %v567
      %v591 = vpack.c.b16 %v589, %v588
      %v592 = vpack.c.b16 %v590, %v590
      %v594 = vshrl.u32 %v591, 16
      %v596 = vshll.u32 %v591, 16
      %v598 = vrot.slane %v596, 1
      %v599 = vor.u32 %v594, %v598
      %v601 = vshll.u32 %v592, 16
      %v603 = vrot.slane %v601, 1
      %v604 = vsel %vm254, %v599, %v603
      %v622 = vunpack.c.l.b16 %v569
      %v623 = vunpack.c.l.b16 %v570
      %v624 = vunpack.c.l.b16 %v571
      %v625 = vunpack.c.l.b16 %v572
      %v626 = vunpack.c.l.b16 %v573
      %v627 = vunpack.c.l.b16 %v574
      %v628 = vunpack.c.l.b16 %v575
      %v629 = vunpack.c.l.b16 %v576
      %v630 = vunpack.c.l.b16 %v577
      %v631 = vunpack.c.l.b16 %v578
      %v632 = vunpack.c.l.b16 %v579
      %v633 = vunpack.c.l.b16 %v580
      %v634 = vunpack.c.l.b16 %v581
      %v635 = vunpack.c.l.b16 %v582
      %v636 = vunpack.c.l.b16 %v583
      %v637 = vunpack.c.l.b16 %v584
      %v638 = vpack.c.b16 %v623, %v622
      %v639 = vpack.c.b16 %v625, %v624
      %v640 = vpack.c.b16 %v627, %v626
      %v641 = vpack.c.b16 %v629, %v628
      %v642 = vpack.c.b16 %v631, %v630
      %v643 = vpack.c.b16 %v633, %v632
      %v644 = vpack.c.b16 %v635, %v634
      %v645 = vpack.c.b16 %v637, %v636
      %654 = vmatprep.subr.bf16.mxu0 0
      %655 = vmatpush1.bf16.msra.mxu0 %v638
      %656 = vmatprep.subr.bf16.mxu0 0
      %657 = vmatpush1.bf16.msra.mxu0 %v639
      %658 = vmatprep.subr.bf16.mxu0 0
      %659 = vmatpush1.bf16.msra.mxu0 %v640
      %660 = vmatprep.subr.bf16.mxu0 0
      %661 = vmatpush1.bf16.msra.mxu0 %v641
      %662 = vmatprep.subr.bf16.mxu0 0
      %663 = vmatpush1.bf16.msra.mxu0 %v642
      %664 = vmatprep.subr.bf16.mxu0 0
      %665 = vmatpush1.bf16.msra.mxu0 %v643
      %666 = vmatprep.subr.bf16.mxu0 0
      %667 = vmatpush1.bf16.msra.mxu0 %v644
      %668 = vmatprep.subr.bf16.mxu0 0
      %669 = vmatpush1.bf16.msra.mxu0 %v645
      %670 = vmatprep.subr.bf16.mxu0 0
      %671 = vmatpush1.bf16.msra.mxu0 0
      %672 = vmatprep.subr.bf16.mxu0 0
      %673 = vmatpush1.bf16.msra.mxu0 0
      %674 = vmatprep.subr.bf16.mxu0 0
      %675 = vmatpush1.bf16.msra.mxu0 0
      %676 = vmatprep.subr.bf16.mxu0 0
      %677 = vmatpush1.bf16.msra.mxu0 0
      %678 = vmatprep.subr.bf16.mxu0 0
      %679 = vmatpush1.bf16.msra.mxu0 0
      %680 = vmatprep.subr.bf16.mxu0 0
      %681 = vmatpush1.bf16.msra.mxu0 0
      %682 = vmatprep.subr.bf16.mxu0 0
      %683 = vmatpush1.bf16.msra.mxu0 0
      %684 = vmatprep.subr.bf16.mxu0 0
      %685 = vmatpush1.bf16.msra.mxu0 0
      %686 = vmatprep.mubr.bf16.mxu0 0
      %687 = vmatmul.mubr.bf16.gmra.mrb[0].mxu0 %v604
      %v688 = vpop.f32.mrb[0].mxu0
      %v689 = vadd.f32 0.0, %v688
      %v690 = vpop.f32.mrb[0].mxu0
      %v691 = vpop.f32.mrb[0].mxu0
      %v692 = vadd.f32 0.0, %v691
      %v693 = vpop.f32.mrb[0].mxu0
      %694 = vdwg.mxu0
      %v712 = vunpack.c.l.b16 %v551
      %v713 = vunpack.c.l.b16 %v552
      %v714 = vunpack.c.l.b16 %v553
      %v715 = vunpack.c.l.b16 %v554
      %v716 = vunpack.c.l.b16 %v555
      %v717 = vunpack.c.l.b16 %v556
      %v718 = vunpack.c.l.b16 %v557
      %v719 = vunpack.c.l.b16 %v558
      %v720 = vunpack.c.l.b16 %v559
      %v721 = vunpack.c.l.b16 %v560
      %v722 = vunpack.c.l.b16 %v561
      %v723 = vunpack.c.l.b16 %v562
      %v724 = vunpack.c.l.b16 %v563
      %v725 = vunpack.c.l.b16 %v564
      %v726 = vunpack.c.l.b16 %v565
      %v727 = vunpack.c.l.b16 %v566
      %v728 = vpack.c.b16 %v713, %v712
      %v729 = vpack.c.b16 %v715, %v714
      %v730 = vpack.c.b16 %v717, %v716
      %v731 = vpack.c.b16 %v719, %v718
      %v732 = vpack.c.b16 %v721, %v720
      %v733 = vpack.c.b16 %v723, %v722
      %v734 = vpack.c.b16 %v725, %v724
      %v735 = vpack.c.b16 %v727, %v726
      %744 = vmatprep.subr.bf16.mxu0 0
      %745 = vmatpush1.bf16.msra.mxu0 %v728
      %746 = vmatprep.subr.bf16.mxu0 0
      %747 = vmatpush1.bf16.msra.mxu0 %v729
      %748 = vmatprep.subr.bf16.mxu0 0
      %749 = vmatpush1.bf16.msra.mxu0 %v730
      %750 = vmatprep.subr.bf16.mxu0 0
      %751 = vmatpush1.bf16.msra.mxu0 %v731
      %752 = vmatprep.subr.bf16.mxu0 0
      %753 = vmatpush1.bf16.msra.mxu0 %v732
      %754 = vmatprep.subr.bf16.mxu0 0
      %755 = vmatpush1.bf16.msra.mxu0 %v733
      %756 = vmatprep.subr.bf16.mxu0 0
      %757 = vmatpush1.bf16.msra.mxu0 %v734
      %758 = vmatprep.subr.bf16.mxu0 0
      %759 = vmatpush1.bf16.msra.mxu0 %v735
      %760 = vmatprep.subr.bf16.mxu0 0
      %761 = vmatpush1.bf16.msra.mxu0 0
      %762 = vmatprep.subr.bf16.mxu0 0
      %763 = vmatpush1.bf16.msra.mxu0 0
      %764 = vmatprep.subr.bf16.mxu0 0
      %765 = vmatpush1.bf16.msra.mxu0 0
      %766 = vmatprep.subr.bf16.mxu0 0
      %767 = vmatpush1.bf16.msra.mxu0 0
      %768 = vmatprep.subr.bf16.mxu0 0
      %769 = vmatpush1.bf16.msra.mxu0 0
      %770 = vmatprep.subr.bf16.mxu0 0
      %771 = vmatpush1.bf16.msra.mxu0 0
      %772 = vmatprep.subr.bf16.mxu0 0
      %773 = vmatpush1.bf16.msra.mxu0 0
      %774 = vmatprep.subr.bf16.mxu0 0
      %775 = vmatpush1.bf16.msra.mxu0 0
      %776 = vmatprep.mubr.bf16.mxu0 0
      %777 = vmatmul.mubr.bf16.gmra.mrb[0].mxu0 %v591
      %v778 = vpop.f32.mrb[0].mxu0
      %v779 = vadd.f32 %v689, %v778
      %v780 = vpop.f32.mrb[0].mxu0
      %v781 = vpop.f32.mrb[0].mxu0
      %v782 = vadd.f32 %v692, %v781
      %v783 = vpop.f32.mrb[0].mxu0
      %784 = vdwg.mxu0
      %v785 = vld [vmem:[#allocation2] sm:$0xe]
      %s786 = scalar_lea.vmem %s2, 128
      %v787 = vld [vmem:[%s786] sm:$0xf]
      %v788 = vld [vmem:[%s786 + $0x4] sm:$0xf]
      %v789 = vld [vmem:[%s786 + $0x8] sm:$0xf]
      %v790 = vld [vmem:[%s786 + $0xc] sm:$0xf]
      %v791 = vld [vmem:[%s786 + $0x10] sm:$0xf]
      %v792 = vld [vmem:[%s786 + $0x14] sm:$0xf]
      %v793 = vld [vmem:[%s786 + $0x18] sm:$0xf]
      %v794 = vld [vmem:[%s786 + $0x1c] sm:$0xf]
      %v795 = vld [vmem:[%s786 + $0x20] sm:$0xf]
      %v796 = vld [vmem:[%s786 + $0x24] sm:$0xf]
      %v797 = vld [vmem:[%s786 + $0x28] sm:$0xf]
      %v798 = vld [vmem:[%s786 + $0x2c] sm:$0xf]
      %v799 = vld [vmem:[%s786 + $0x30] sm:$0xf]
      %v800 = vld [vmem:[%s786 + $0x34] sm:$0xf]
      %v801 = vld [vmem:[%s786 + $0x38] sm:$0xf]
      %v802 = vld [vmem:[%s786 + $0x3c] sm:$0xf]
      %v804 = vunpack.c.l.b16 %v785
      %v805 = vpack.c.b16 %v589, %v804
      %v806 = vrot.slane %v805, 1
      %v807 = vrot.slane %v592, 1
      %v808 = vsel %vm416, %v806, %v807
      %v826 = vunpack.c.l.b16 %v787
      %v827 = vunpack.c.l.b16 %v788
      %v828 = vunpack.c.l.b16 %v789
      %v829 = vunpack.c.l.b16 %v790
      %v830 = vunpack.c.l.b16 %v791
      %v831 = vunpack.c.l.b16 %v792
      %v832 = vunpack.c.l.b16 %v793
      %v833 = vunpack.c.l.b16 %v794
      %v834 = vunpack.c.l.b16 %v795
      %v835 = vunpack.c.l.b16 %v796
      %v836 = vunpack.c.l.b16 %v797
      %v837 = vunpack.c.l.b16 %v798
      %v838 = vunpack.c.l.b16 %v799
      %v839 = vunpack.c.l.b16 %v800
      %v840 = vunpack.c.l.b16 %v801
      %v841 = vunpack.c.l.b16 %v802
      %v842 = vpack.c.b16 %v827, %v826
      %v843 = vpack.c.b16 %v829, %v828
      %v844 = vpack.c.b16 %v831, %v830
      %v845 = vpack.c.b16 %v833, %v832
      %v846 = vpack.c.b16 %v835, %v834
      %v847 = vpack.c.b16 %v837, %v836
      %v848 = vpack.c.b16 %v839, %v838
      %v849 = vpack.c.b16 %v841, %v840
      %858 = vmatprep.subr.bf16.mxu0 0
      %859 = vmatpush1.bf16.msra.mxu0 %v842
      %860 = vmatprep.subr.bf16.mxu0 0
      %861 = vmatpush1.bf16.msra.mxu0 %v843
      %862 = vmatprep.subr.bf16.mxu0 0
      %863 = vmatpush1.bf16.msra.mxu0 %v844
      %864 = vmatprep.subr.bf16.mxu0 0
      %865 = vmatpush1.bf16.msra.mxu0 %v845
      %866 = vmatprep.subr.bf16.mxu0 0
      %867 = vmatpush1.bf16.msra.mxu0 %v846
      %868 = vmatprep.subr.bf16.mxu0 0
      %869 = vmatpush1.bf16.msra.mxu0 %v847
      %870 = vmatprep.subr.bf16.mxu0 0
      %871 = vmatpush1.bf16.msra.mxu0 %v848
      %872 = vmatprep.subr.bf16.mxu0 0
      %873 = vmatpush1.bf16.msra.mxu0 %v849
      %874 = vmatprep.subr.bf16.mxu0 0
      %875 = vmatpush1.bf16.msra.mxu0 0
      %876 = vmatprep.subr.bf16.mxu0 0
      %877 = vmatpush1.bf16.msra.mxu0 0
      %878 = vmatprep.subr.bf16.mxu0 0
      %879 = vmatpush1.bf16.msra.mxu0 0
      %880 = vmatprep.subr.bf16.mxu0 0
      %881 = vmatpush1.bf16.msra.mxu0 0
      %882 = vmatprep.subr.bf16.mxu0 0
      %883 = vmatpush1.bf16.msra.mxu0 0
      %884 = vmatprep.subr.bf16.mxu0 0
      %885 = vmatpush1.bf16.msra.mxu0 0
      %886 = vmatprep.subr.bf16.mxu0 0
      %887 = vmatpush1.bf16.msra.mxu0 0
      %888 = vmatprep.subr.bf16.mxu0 0
      %889 = vmatpush1.bf16.msra.mxu0 0
      %890 = vmatprep.mubr.bf16.mxu0 0
      %891 = vmatmul.mubr.bf16.gmra.mrb[0].mxu0 %v808
      %v892 = vpop.f32.mrb[0].mxu0
      %v893 = vadd.f32 0.0, %v892
      %v894 = vpop.f32.mrb[0].mxu0
      %v895 = vpop.f32.mrb[0].mxu0
      %v896 = vadd.f32 0.0, %v895
      %v897 = vpop.f32.mrb[0].mxu0
      %898 = vdwg.mxu0
      %v899 = vadd.f32 %v779, %v893
      %v900 = vadd.f32 %v782, %v896
      %v901 = vld [vmem:[%s4] sm:$0x1]
      %v903 = vlaneseq
      %v904 = vshrl.u32 %v903, 7
      %v905 = vsub.s32 0, %v904
      %v906 = vrot.slane %v901, %v905
      %v908 = vadd.f32 %v899, %v906
      %v909 = vadd.f32 %v900, %v906
      %v910 = vmax.f32 %v908, 0.0
      %v911 = vmax.f32 %v909, 0.0
      %v912 = vpack.c.bf16 %v911, %v910
      %v914 = vunpack.c.l.b16 %v912
      %v915 = vunpack.c.h.b16 %v912
      %v916 = vpack.c.b16 %v914, %v914
      %v917 = vpack.c.b16 %v915, %v915
      %920 = vst [vmem:[%s224] sm:$0xf] %v916
      %921 = vst [vmem:[%s224 + $0x4] sm:$0xf] %v917
      %p922 = scmp.lt.s32.totalorder %s16, 1
      %s923 = scalar_select %p922, %s16, 1
      %s924 = smul.addr %s923, 2
      %s925 = smul.addr %s924, 4
      %s926 = scalar_lea.vmem %s5, %s925
      // Predicated region
      $region41: #{residual_block_forward.1} parent=39 // pred_check
        %p927 = pneg %p144
      $region42: #{residual_block_forward.1} parent=39 // pred_check_branch
        %929 = sbr.rel (%p927) target = $region44
      $region43: #{residual_block_forward.1} parent=39 // pred_region
        _
      $region44: #{residual_block_forward.1} parent=39 // pred_fallthru
        _
    $region40: #{residual_block_forward.1} parent=5 // pred_fallthru
      _
    %p930 = scmp.le.s32.totalorder 2, %s11
    // Predicated region
    $region45: #{residual_block_forward.1} parent=5 // pred_check
      %p931 = pneg %p930
    $region46: #{residual_block_forward.1} parent=5 // pred_check_branch
      %933 = sbr.rel (%p931) target = $region48
    $region47: #{residual_block_forward.1} parent=5 // pred_region
      %s934 = ssub.s32 %s11, 2
      // Predicated region
      $region49: #{residual_block_forward.1} parent=47 // pred_check
        %p935 = pneg %p150
      $region50: #{residual_block_forward.1} parent=47 // pred_check_branch
        %937 = sbr.rel (%p935) target = $region52
      $region51: #{residual_block_forward.1} parent=47 // pred_region
        %p938 = scmp.lt.s32.totalorder %s17, 1
        %s939 = scalar_select %p938, %s17, 1
        %s940 = smul.addr %s939, 2
        %s941 = smul.addr %s940, 4
        %s942 = scalar_lea.vmem %s5, %s941
      $region52: #{residual_block_forward.1} parent=47 // pred_fallthru
        _
    $region48: #{residual_block_forward.1} parent=5 // pred_fallthru
      _
  $region6: #{residual_block_forward.1} parent=0 // loop_footer
    %s15 = sadd.s32 1, %s11
  $region7: #{residual_block_forward.1} parent=0 // loop_footer_branch
    %10 = sbr.rel target = $region3
  $region8: #{residual_block_forward.1} parent=0 // loop_exit
    _

</llo_original>
